<compile_context>
chip_gen: v7x
topology: tpu7x:2x2x1
jax: 0.10.0
libtpu: 0.0.40
codegen_flags: <defaults>
</compile_context>

<pallas_src>
import functools

import jax
import jax.numpy as jnp
import numpy as np
from jax.experimental import pallas as pl
from jax.experimental.pallas import tpu as pltpu

_MASK_VALUE = -1e30   # finite "minus infinity": fully-masked rows stay NaN-free


# ----------------------------------------------------------------------------
# Generation-aware VMEM budgets
# ----------------------------------------------------------------------------
@functools.lru_cache(maxsize=None)
def _vmem_capacity_bytes():
    try:
        return int(pltpu.get_tpu_info().vmem_capacity_bytes)
    except Exception:
        return 64 * 1024 * 1024        # conservative fallback (v7x per-core VMEM)


@functools.lru_cache(maxsize=None)
def _vmem_limit_bytes():
    # ~75% of physical VMEM, capped: 48 MiB on v7x (64 MiB), 96->100 MiB on v5e/v6e.
    return min(int(_vmem_capacity_bytes() * 0.75), 100 * 1024 * 1024)


def _pick_row_tile(n, per_row_bytes, resident_bytes, budget):
    """Largest row tile (<=512, multiple of 8) whose double-buffered working set fits."""
    t = 512
    while t > 8 and resident_bytes + 2 * per_row_bytes * t > budget:
        t //= 2
    return n if n <= t else t


def _sdpa_working_set_bytes(h, tq, len_k, d_k, d_v, attn_bytes, mask_bytes):
    in_bufs = 2 * 2 * (tq * h * d_k + len_k * h * d_k + len_k * h * d_v)  # bf16, dbl-buf
    mask_buf = 2 * mask_bytes * tq * len_k
    ctx_buf = 2 * 2 * tq * h * d_v                                        # bf16 out
    attn_buf = 2 * attn_bytes * h * tq * len_k
    scores = 2 * 4 * h * tq * len_k                                       # s + exp temps f32
    return in_bufs + mask_buf + ctx_buf + attn_buf + scores


def _pick_sdpa_blocks(n_head, d_k, d_v, len_q, len_k, attn_bytes, mask_bytes, budget):
    """Heads per SDPA grid step + len_q tile.

    h must divide n_head and either cover all heads (block == full feature dim)
    or give 128-lane-aligned q/k/v/ctx blocks; prefer 256-lane (full MXU width)
    alignment, then the largest head block; then the largest q tile that fits.
    """
    hs = [h for h in range(1, n_head + 1)
          if n_head % h == 0
          and (h == n_head or (h * d_k % 128 == 0 and h * d_v % 128 == 0))]
    hs.sort(key=lambda h: ((h * d_k) % 256 == 0, h), reverse=True)
    if len_q <= 512:
        tqs = [len_q]
    else:
        tqs = [t for t in (512, 256, 128, 64, 32, 16, 8) if t < len_q]
    for h in hs:
        for tq in tqs:
            if _sdpa_working_set_bytes(h, tq, len_k, d_k, d_v,
                                       attn_bytes, mask_bytes) <= budget:
                return h, tq
    return min(hs), tqs[-1]


# ----------------------------------------------------------------------------
# Kernel 1a: fused QKV projection (self-attention), row-tiled
# ----------------------------------------------------------------------------
def _qkv_proj_kernel(x_ref, wq_ref, wk_ref, wv_ref, bq_ref, bk_ref, bv_ref,
                     q_ref, k_ref, v_ref):
    x = x_ref[...].astype(jnp.bfloat16)            # activation cast on-chip
    q_ref[...] = (jnp.dot(x, wq_ref[...], preferred_element_type=jnp.float32)
                  + bq_ref[...]).astype(q_ref.dtype)
    k_ref[...] = (jnp.dot(x, wk_ref[...], preferred_element_type=jnp.float32)
                  + bk_ref[...]).astype(k_ref.dtype)
    v_ref[...] = (jnp.dot(x, wv_ref[...], preferred_element_type=jnp.float32)
                  + bv_ref[...]).astype(v_ref.dtype)


def qkv_project(x2d, wq, wk, wv, bq, bk, bv):
    n, d_model = x2d.shape
    dq, dk_, dv_ = wq.shape[1], wk.shape[1], wv.shape[1]
    d_out = dq + dk_ + dv_
    per_row = d_model * 4 + d_out * 2
    resident = 2 * (d_model * d_out * 2 + d_out * 4)
    tm = _pick_row_tile(n, per_row, resident, _vmem_limit_bytes())
    row = lambda i: (i, 0)
    full = lambda i: (0, 0)
    return pl.pallas_call(
        _qkv_proj_kernel,
        out_shape=(
            jax.ShapeDtypeStruct((n, dq), jnp.bfloat16),
            jax.ShapeDtypeStruct((n, dk_), jnp.bfloat16),
            jax.ShapeDtypeStruct((n, dv_), jnp.bfloat16),
        ),
        grid_spec=pltpu.PrefetchScalarGridSpec(
            num_scalar_prefetch=0,
            grid=(pl.cdiv(n, tm),),
            in_specs=[
                pl.BlockSpec((tm, d_model), row),
                pl.BlockSpec((d_model, dq), full),
                pl.BlockSpec((d_model, dk_), full),
                pl.BlockSpec((d_model, dv_), full),
                pl.BlockSpec((1, dq), full),
                pl.BlockSpec((1, dk_), full),
                pl.BlockSpec((1, dv_), full),
            ],
            out_specs=(
                pl.BlockSpec((tm, dq), row),
                pl.BlockSpec((tm, dk_), row),
                pl.BlockSpec((tm, dv_), row),
            ),
        ),
        compiler_params=pltpu.CompilerParams(
            dimension_semantics=("parallel",),
            vmem_limit_bytes=_vmem_limit_bytes()),
    )(x2d, wq, wk, wv, bq, bk, bv)


# ----------------------------------------------------------------------------
# Kernel 1b: plain linear (cross-attention fallback), row-tiled
# ----------------------------------------------------------------------------
def _linear_kernel(x_ref, w_ref, b_ref, o_ref):
    x = x_ref[...].astype(jnp.bfloat16)
    y = jnp.dot(x, w_ref[...], preferred_element_type=jnp.float32)
    o_ref[...] = (y + b_ref[...]).astype(o_ref.dtype)


def linear(x2d, w_bf16, b):
    n, d_in = x2d.shape
    d_out = w_bf16.shape[1]
    per_row = d_in * 4 + d_out * 2
    resident = 2 * (d_in * d_out * 2 + d_out * 4)
    tm = _pick_row_tile(n, per_row, resident, _vmem_limit_bytes())
    return pl.pallas_call(
        _linear_kernel,
        out_shape=jax.ShapeDtypeStruct((n, d_out), jnp.bfloat16),
        grid_spec=pltpu.PrefetchScalarGridSpec(
            num_scalar_prefetch=0,
            grid=(pl.cdiv(n, tm),),
            in_specs=[
                pl.BlockSpec((tm, d_in), lambda i: (i, 0)),
                pl.BlockSpec((d_in, d_out), lambda i: (0, 0)),
                pl.BlockSpec((1, d_out), lambda i: (0, 0)),
            ],
            out_specs=pl.BlockSpec((tm, d_out), lambda i: (i, 0)),
        ),
        compiler_params=pltpu.CompilerParams(
            dimension_semantics=("parallel",),
            vmem_limit_bytes=_vmem_limit_bytes()),
    )(x2d, w_bf16, b)


# ----------------------------------------------------------------------------
# Kernel 2: scaled dot-product attention, grid over (batch, head-block, q-tile)
# ----------------------------------------------------------------------------
def _sdpa_kernel(*refs, h_blk, d_k, d_v, has_mask, return_attn):
    idx = 0
    q_ref = refs[idx]; idx += 1
    k_ref = refs[idx]; idx += 1
    v_ref = refs[idx]; idx += 1
    mask_ref = None
    if has_mask:
        mask_ref = refs[idx]; idx += 1
    ctx_ref = refs[idx]; idx += 1
    attn_ref = refs[idx] if return_attn else None

    tq = q_ref.shape[1]
    len_k = k_ref.shape[1]

    # (len, h_blk*d) -> (len, h_blk, d); already bf16 from the projection kernel
    q = q_ref[0].reshape(tq, h_blk, d_k)
    k = k_ref[0].reshape(len_k, h_blk, d_k)
    v = v_ref[0].reshape(len_k, h_blk, d_v)

    # scores: MXU in bf16, accumulate f32.  1/sqrt(d_k) is already folded into
    # the q projection weights -> no extra VALU multiply on the score tile.
    s = jnp.einsum("qhd,khd->hqk", q, k, preferred_element_type=jnp.float32)

    if has_mask:
        masked = (mask_ref[0] != 0)[None, :, :]                 # (1, tq, len_k) bool
        s = jnp.where(masked, jnp.float32(_MASK_VALUE), s)      # masked_fill semantics

    # softmax over keys, f32 on VPU/EUP; exact reciprocal on the tiny (h,q,1)
    # denominator so returned attn rows sum to 1 (context multiply unchanged).
    m = jnp.max(s, axis=-1, keepdims=True)
    e = jnp.exp(s - m)
    denom = jnp.sum(e, axis=-1, keepdims=True)
    p = e * pl.reciprocal(denom, approx=False)

    # TODO(synk): training-mode dropout on attention probabilities not implemented.
    if return_attn:
        attn_ref[...] = p.reshape(h_blk, 1, tq, len_k).astype(attn_ref.dtype)

    o = jnp.einsum("hqk,khd->qhd", p.astype(jnp.bfloat16), v,
                   preferred_element_type=jnp.float32)
    # lane-dense (tq, h_blk*d_v) context write
    ctx_ref[...] = o.reshape(1, tq, h_blk * d_v).astype(ctx_ref.dtype)


def scaled_dot_product_attention(q3, k3, v3, mask_i8, *, n_head, d_k, d_v,
                                 return_attn=True, attn_dtype=jnp.float32):
    """q3/k3/v3: (bsz, len, n_head*d) bf16; mask_i8: (bsz, len_q, len_k) int8 or None.

    Returns (ctx, attn): ctx (bsz, len_q, n_head*d_v) bf16,
    attn (n_head, bsz, len_q, len_k) attn_dtype or None when return_attn=False.
    """
    bsz, len_q, _ = q3.shape
    _, len_k, _ = k3.shape
    has_mask = mask_i8 is not None
    attn_bytes = jnp.dtype(attn_dtype).itemsize if return_attn else 0
    h_blk, tq = _pick_sdpa_blocks(
        n_head, d_k, d_v, len_q, len_k, attn_bytes,
        1 if has_mask else 0, budget=_vmem_capacity_bytes() // 4)
    n_hb = n_head // h_blk
    n_qt = pl.cdiv(len_q, tq)

    kernel = functools.partial(_sdpa_kernel, h_blk=h_blk, d_k=d_k, d_v=d_v,
                               has_mask=has_mask, return_attn=return_attn)

    in_specs = [
        pl.BlockSpec((1, tq, h_blk * d_k), lambda b, hb, qt: (b, qt, hb)),
        pl.BlockSpec((1, len_k, h_blk * d_k), lambda b, hb, qt: (b, 0, hb)),
        pl.BlockSpec((1, len_k, h_blk * d_v), lambda b, hb, qt: (b, 0, hb)),
    ]
    inputs = [q3, k3, v3]
    if has_mask:
        # one int8 (len_q, len_k) mask tile per batch/q-tile, re-used per head block
        in_specs.append(pl.BlockSpec((1, tq, len_k), lambda b, hb, qt: (b, qt, 0)))
        inputs.append(mask_i8)

    out_shape = [jax.ShapeDtypeStruct((bsz, len_q, n_head * d_v), jnp.bfloat16)]
    out_specs = [pl.BlockSpec((1, tq, h_blk * d_v), lambda b, hb, qt: (b, qt, hb))]
    if return_attn:
        out_shape.append(jax.ShapeDtypeStruct((n_head, bsz, len_q, len_k), attn_dtype))
        out_specs.append(
            pl.BlockSpec((h_blk, 1, tq, len_k), lambda b, hb, qt: (hb, b, qt, 0)))

    results = pl.pallas_call(
        kernel,
        out_shape=tuple(out_shape),
        grid_spec=pltpu.PrefetchScalarGridSpec(
            num_scalar_prefetch=0,
            grid=(bsz, n_hb, n_qt),
            in_specs=in_specs,
            out_specs=tuple(out_specs),
        ),
        compiler_params=pltpu.CompilerParams(
            dimension_semantics=("parallel", "parallel", "parallel"),
            vmem_limit_bytes=_vmem_limit_bytes()),
    )(*inputs)

    if return_attn:
        ctx, attn = results
        return ctx, attn
    (ctx,) = results
    return ctx, None


# ----------------------------------------------------------------------------
# Kernel 3: fc projection + residual + LayerNorm (fused), row-tiled
# ----------------------------------------------------------------------------
def _fc_ln_kernel(x_ref, w_ref, b_ref, res_ref, g_ref, beta_ref, o_ref, *, eps):
    y = jnp.dot(x_ref[...].astype(jnp.bfloat16), w_ref[...],
                preferred_element_type=jnp.float32) + b_ref[...]
    # TODO(synk): training-mode dropout on the fc output not implemented (eval mode).
    y = y + res_ref[...]
    mean = jnp.mean(y, axis=-1, keepdims=True)
    var = jnp.mean(jnp.square(y - mean), axis=-1, keepdims=True)
    norm = (y - mean) * jax.lax.rsqrt(var + eps)
    o_ref[...] = (norm * g_ref[...] + beta_ref[...]).astype(o_ref.dtype)


def fc_residual_layernorm(x2d, w_bf16, b, res2d, gamma, beta, eps=1e-5,
                          out_dtype=jnp.float32):
    n, d_in = x2d.shape
    d_model = w_bf16.shape[1]
    per_row = d_in * 2 + d_model * 4 + d_model * jnp.dtype(out_dtype).itemsize
    resident = 2 * (d_in * d_model * 2 + 3 * d_model * 4)
    tm = _pick_row_tile(n, per_row, resident, _vmem_limit_bytes())
    kernel = functools.partial(_fc_ln_kernel, eps=eps)
    return pl.pallas_call(
        kernel,
        out_shape=jax.ShapeDtypeStruct((n, d_model), out_dtype),
        grid_spec=pltpu.PrefetchScalarGridSpec(
            num_scalar_prefetch=0,
            grid=(pl.cdiv(n, tm),),
            in_specs=[
                pl.BlockSpec((tm, d_in), lambda i: (i, 0)),
                pl.BlockSpec((d_in, d_model), lambda i: (0, 0)),
                pl.BlockSpec((1, d_model), lambda i: (0, 0)),
                pl.BlockSpec((tm, d_model), lambda i: (i, 0)),
                pl.BlockSpec((1, d_model), lambda i: (0, 0)),
                pl.BlockSpec((1, d_model), lambda i: (0, 0)),
            ],
            out_specs=pl.BlockSpec((tm, d_model), lambda i: (i, 0)),
        ),
        compiler_params=pltpu.CompilerParams(
            dimension_semantics=("parallel",),
            vmem_limit_bytes=_vmem_limit_bytes()),
    )(x2d, w_bf16, b, res2d, gamma, beta)


# ----------------------------------------------------------------------------
# Full _MultiHeadAttention forward
# ----------------------------------------------------------------------------
def multi_head_attention(params, q, k, v, mask=None, *, is_self_attention=None,
                         return_attn=True, attn_dtype=jnp.float32):
    """
    q: (bsz, len_q, d_model), k: (bsz, len_k, d_model), v: (bsz, len_v, d_model)
    mask: (bsz, len_q, len_k) bool (True == masked out) or None
    returns: output (bsz, len_q, d_model) f32,
             attn (n_head*bsz, len_q, len_k) attn_dtype (None if return_attn=False)
    """
    n_head = params["n_head"]
    d_k = params["d_k"]
    d_v = params["d_v"]
    d_model = params["d_model"]

    bsz, len_q, _ = q.shape
    _, len_k, _ = k.shape
    _, len_v, _ = v.shape

    residual = q.reshape(bsz * len_q, d_model)

    # weights fed to the MXU as bf16 (one-time cast; master params stay f32);
    # 1/sqrt(d_k) folded into the q projection (removes a full score-tile mul).
    inv_temp = jnp.float32(1.0 / np.sqrt(d_k))
    wq = (params["w_qs_w"] * inv_temp).astype(jnp.bfloat16)
    bq = params["w_qs_b"] * inv_temp
    wk = params["w_ks_w"].astype(jnp.bfloat16)
    wv = params["w_vs_w"].astype(jnp.bfloat16)
    wf = params["fc_w"].astype(jnp.bfloat16)

    if is_self_attention is None:
        is_self_attention = (q is k) and (k is v)

    xq = q.reshape(bsz * len_q, d_model)
    if is_self_attention:
        # self-attention: fused QKV projection, activation read from HBM once
        q_proj, k_proj, v_proj = qkv_project(
            xq, wq, wk, wv, bq, params["w_ks_b"], params["w_vs_b"])
    else:
        q_proj = linear(xq, wq, bq)
        k_proj = linear(k.reshape(bsz * len_k, d_model), wk, params["w_ks_b"])
        v_proj = linear(v.reshape(bsz * len_v, d_model), wv, params["w_vs_b"])

    # free reshapes (no transpose): head split is done by the SDPA BlockSpecs
    q3 = q_proj.reshape(bsz, len_q, n_head * d_k)
    k3 = k_proj.reshape(bsz, len_k, n_head * d_k)
    v3 = v_proj.reshape(bsz, len_v, n_head * d_v)

    # mask as int8 (1 B/elem); None => no mask operand at all
    mask_i8 = None if mask is None else mask.astype(jnp.int8)

    ctx, attn4 = scaled_dot_product_attention(
        q3, k3, v3, mask_i8, n_head=n_head, d_k=d_k, d_v=d_v,
        return_attn=return_attn, attn_dtype=attn_dtype)

    out = fc_residual_layernorm(
        ctx.reshape(bsz * len_q, n_head * d_v), wf, params["fc_b"],
        residual, params["ln_gamma"], params["ln_beta"])
    out = out.reshape(bsz, len_q, d_model)

    if not return_attn:
        return out, None
    # (n_head, bsz, len_q, len_k) -> (n_head*bsz, len_q, len_k): free reshape,
    # matches torch's head-major attn layout (index = head*bsz + b).
    attn = attn4.reshape(n_head * bsz, len_q, len_k)
    return out, attn


# ----------------------------------------------------------------------------
# Pure-jnp reference (f32) for validation — mirrors the PyTorch module, eval mode
# ----------------------------------------------------------------------------
def reference_mha(params, q, k, v, mask):
    n_head, d_k, d_v, d_model = (params["n_head"], params["d_k"],
                                 params["d_v"], params["d_model"])
    bsz, len_q, _ = q.shape
    _, len_k, _ = k.shape

    qp = q.reshape(-1, d_model) @ params["w_qs_w"] + params["w_qs_b"]
    kp = k.reshape(-1, d_model) @ params["w_ks_w"] + params["w_ks_b"]
    vp = v.reshape(-1, d_model) @ params["w_vs_w"] + params["w_vs_b"]

    def split(x, length, d):
        return (x.reshape(bsz, length, n_head, d)
                 .transpose(2, 0, 1, 3).reshape(n_head * bsz, length, d))

    qh, kh, vh = split(qp, len_q, d_k), split(kp, len_k, d_k), split(vp, len_k, d_v)
    s = jnp.einsum("bqd,bkd->bqk", qh, kh) / np.sqrt(d_k)
    if mask is not None:
        s = jnp.where(jnp.tile(mask, (n_head, 1, 1)), _MASK_VALUE, s)
    attn = jax.nn.softmax(s, axis=-1)
    ctx = jnp.einsum("bqk,bkd->bqd", attn, vh)
    ctx = (ctx.reshape(n_head, bsz, len_q, d_v)
              .transpose(1, 2, 0, 3).reshape(bsz * len_q, n_head * d_v))
    y = ctx @ params["fc_w"] + params["fc_b"] + q.reshape(-1, d_model)
    mean = y.mean(-1, keepdims=True)
    var = ((y - mean) ** 2).mean(-1, keepdims=True)
    y = (y - mean) / jnp.sqrt(var + 1e-5) * params["ln_gamma"] + params["ln_beta"]
    return y.reshape(bsz, len_q, d_model), attn


# ----------------------------------------------------------------------------
# Deterministic parameter init (mirrors the PyTorch __init__ shapes)
# ----------------------------------------------------------------------------
def init_params(key, n_head, d_model, d_k, d_v):
    k1, k2, k3, k4 = jax.random.split(key, 4)
    std_qk = np.sqrt(2.0 / (d_model + d_k))
    std_v = np.sqrt(2.0 / (d_model + d_v))
    std_fc = np.sqrt(2.0 / (n_head * d_v + d_model))   # xavier_normal

    return {
        "n_head": n_head, "d_model": d_model, "d_k": d_k, "d_v": d_v,
        # weights stored already transposed: (d_in, d_out)
        "w_qs_w": jax.random.normal(k1, (d_model, n_head * d_k), jnp.float32) * std_qk,
        "w_ks_w": jax.random.normal(k2, (d_model, n_head * d_k), jnp.float32) * std_qk,
        "w_vs_w": jax.random.normal(k3, (d_model, n_head * d_v), jnp.float32) * std_v,
        "fc_w":   jax.random.normal(k4, (n_head * d_v, d_model), jnp.float32) * std_fc,
        "w_qs_b": jnp.zeros((1, n_head * d_k), jnp.float32),
        "w_ks_b": jnp.zeros((1, n_head * d_k), jnp.float32),
        "w_vs_b": jnp.zeros((1, n_head * d_v), jnp.float32),
        "fc_b":   jnp.zeros((1, d_model), jnp.float32),
        "ln_gamma": jnp.ones((1, d_model), jnp.float32),
        "ln_beta":  jnp.zeros((1, d_model), jnp.float32),
    }


if __name__ == "__main__":
    bsz, seq, d_model = 2, 8, 32
    n_head, d_k, d_v = 2, 16, 16

    key = jax.random.PRNGKey(0)
    kp, kx, kk, kv = jax.random.split(key, 4)
    params = init_params(kp, n_head, d_model, d_k, d_v)

    # ---- self-attention (fused QKV projection path), f32 attn ----
    x = jax.random.normal(kx, (bsz, seq, d_model), jnp.float32)
    mask = jnp.zeros((bsz, seq, seq), dtype=bool).at[1, :, seq - 2:].set(True)

    out, attn = multi_head_attention(params, x, x, x, mask)
    out = jax.block_until_ready(out)
    attn = jax.block_until_ready(attn)

    assert out.shape == (bsz, seq, d_model)
    assert attn.shape == (n_head * bsz, seq, seq)
    assert bool(jnp.all(jnp.isfinite(out))) and bool(jnp.all(jnp.isfinite(attn)))
    # exact reciprocal in the kernel => softmax rows sum to 1 tightly
    assert bool(jnp.allclose(jnp.sum(attn, axis=-1), 1.0, atol=1e-4))
    # masked key columns get ~zero probability (batch 1 lives at attn[h*bsz + 1])
    assert float(jnp.max(attn.reshape(n_head, bsz, seq, seq)[:, 1, :, seq - 2:])) < 1e-6

    out_ref, attn_ref = reference_mha(params, x, x, x, mask)
    assert float(jnp.max(jnp.abs(out - out_ref))) < 0.15     # bf16 matmuls
    assert float(jnp.max(jnp.abs(attn - attn_ref))) < 0.05

    # ---- attn output skipped entirely (dominant HBM write removed) ----
    out_na, attn_na = multi_head_attention(params, x, x, x, mask, return_attn=False)
    out_na = jax.block_until_ready(out_na)
    assert attn_na is None
    assert float(jnp.max(jnp.abs(out_na - out))) < 1e-5

    # ---- mask=None path (no mask operand) + bf16 attn output ----
    out_nm, attn_nm = multi_head_attention(params, x, x, x, None,
                                           attn_dtype=jnp.bfloat16)
    out_nm = jax.block_until_ready(out_nm)
    attn_nm = jax.block_until_ready(attn_nm)
    out_nm_ref, attn_nm_ref = reference_mha(params, x, x, x, None)
    assert float(jnp.max(jnp.abs(out_nm - out_nm_ref))) < 0.15
    assert float(jnp.max(jnp.abs(attn_nm.astype(jnp.float32) - attn_nm_ref))) < 0.05

    # ---- cross-attention (separate-projection path, len_k != len_q) ----
    len_kv = 12
    k_in = jax.random.normal(kk, (bsz, len_kv, d_model), jnp.float32)
    v_in = jax.random.normal(kv, (bsz, len_kv, d_model), jnp.float32)
    mask2 = jnp.zeros((bsz, seq, len_kv), dtype=bool).at[0, :, :3].set(True)

    out2, attn2 = multi_head_attention(params, x, k_in, v_in, mask2)
    out2 = jax.block_until_ready(out2)
    attn2 = jax.block_until_ready(attn2)

    assert out2.shape == (bsz, seq, d_model)
    assert attn2.shape == (n_head * bsz, seq, len_kv)
    out2_ref, attn2_ref = reference_mha(params, x, k_in, v_in, mask2)
    assert float(jnp.max(jnp.abs(out2 - out2_ref))) < 0.15
    assert float(jnp.max(jnp.abs(attn2 - attn2_ref))) < 0.05

    print("KERNEL_OK")
</pallas_src>

<mosaic_0001>
module attributes {stable_mosaic.version = 11 : i64} {
  func.func @_qkv_proj_kernel(%arg0: i32, %arg1: memref<16x32xf32, #tpu.memory_space<vmem>>, %arg2: memref<32x32xbf16, #tpu.memory_space<vmem>>, %arg3: memref<32x32xbf16, #tpu.memory_space<vmem>>, %arg4: memref<32x32xbf16, #tpu.memory_space<vmem>>, %arg5: memref<1x32xf32, #tpu.memory_space<vmem>>, %arg6: memref<1x32xf32, #tpu.memory_space<vmem>>, %arg7: memref<1x32xf32, #tpu.memory_space<vmem>>, %arg8: memref<16x32xbf16, #tpu.memory_space<vmem>>, %arg9: memref<16x32xbf16, #tpu.memory_space<vmem>>, %arg10: memref<16x32xbf16, #tpu.memory_space<vmem>>) attributes {dimension_semantics = [#tpu.dimension_semantics<parallel>], iteration_bounds = array<i64: 1>, scalar_prefetch = 0 : i64, scratch_operands = 0 : i64, tpu.core_type = #tpu.core_type<tc>, window_params = [{transform_indices = @transform_0, window_bounds = array<i64: 16, 32>}, {pipeline_mode = #tpu.pipeline_mode<synchronous>, transform_indices = @transform_1, window_bounds = array<i64: 32, 32>}, {pipeline_mode = #tpu.pipeline_mode<synchronous>, transform_indices = @transform_2, window_bounds = array<i64: 32, 32>}, {pipeline_mode = #tpu.pipeline_mode<synchronous>, transform_indices = @transform_3, window_bounds = array<i64: 32, 32>}, {pipeline_mode = #tpu.pipeline_mode<synchronous>, transform_indices = @transform_4, window_bounds = array<i64: 1, 32>}, {pipeline_mode = #tpu.pipeline_mode<synchronous>, transform_indices = @transform_5, window_bounds = array<i64: 1, 32>}, {pipeline_mode = #tpu.pipeline_mode<synchronous>, transform_indices = @transform_6, window_bounds = array<i64: 1, 32>}, {transform_indices = @transform_7, window_bounds = array<i64: 16, 32>}, {transform_indices = @transform_8, window_bounds = array<i64: 16, 32>}, {transform_indices = @transform_9, window_bounds = array<i64: 16, 32>}]} {
    %c0 = arith.constant 0 : index
    %c0_0 = arith.constant 0 : index
    %0 = vector.load %arg1[%c0, %c0_0] : memref<16x32xf32, #tpu.memory_space<vmem>>, vector<16x32xf32>
    %1 = arith.truncf %0 : vector<16x32xf32> to vector<16x32xbf16>
    %c0_1 = arith.constant 0 : index
    %c0_2 = arith.constant 0 : index
    %2 = vector.load %arg2[%c0_1, %c0_2] : memref<32x32xbf16, #tpu.memory_space<vmem>>, vector<32x32xbf16>
    %cst = arith.constant dense<0.000000e+00> : vector<16x32xf32>
    %3 = tpu.matmul %1, %2, %cst {dimension_numbers = #tpu.dot_dimension_numbers<[1], [0], [0], [1], [0, 0, 1, 1], [], []>} : vector<16x32xbf16>, vector<32x32xbf16>, vector<16x32xf32> -> vector<16x32xf32>
    %c0_3 = arith.constant 0 : index
    %c0_4 = arith.constant 0 : index
    %4 = vector.load %arg5[%c0_3, %c0_4] : memref<1x32xf32, #tpu.memory_space<vmem>>, vector<1x32xf32>
    %5 = vector.broadcast %4 : vector<1x32xf32> to vector<16x32xf32>
    %6 = arith.addf %3, %5 : vector<16x32xf32>
    %7 = arith.truncf %6 : vector<16x32xf32> to vector<16x32xbf16>
    %c0_5 = arith.constant 0 : index
    %c0_6 = arith.constant 0 : index
    %8 = vector.load %arg8[%c0_5, %c0_6] : memref<16x32xbf16, #tpu.memory_space<vmem>>, vector<16x32xbf16>
    tpu.vector_store %arg8[%c0_5, %c0_6], %7 {strides = array<i32>} : memref<16x32xbf16, #tpu.memory_space<vmem>>, vector<16x32xbf16>,
    %c0_7 = arith.constant 0 : index
    %c0_8 = arith.constant 0 : index
    %9 = vector.load %arg3[%c0_7, %c0_8] : memref<32x32xbf16, #tpu.memory_space<vmem>>, vector<32x32xbf16>
    %cst_9 = arith.constant dense<0.000000e+00> : vector<16x32xf32>
    %10 = tpu.matmul %1, %9, %cst_9 {dimension_numbers = #tpu.dot_dimension_numbers<[1], [0], [0], [1], [0, 0, 1, 1], [], []>} : vector<16x32xbf16>, vector<32x32xbf16>, vector<16x32xf32> -> vector<16x32xf32>
    %c0_10 = arith.constant 0 : index
    %c0_11 = arith.constant 0 : index
    %11 = vector.load %arg6[%c0_10, %c0_11] : memref<1x32xf32, #tpu.memory_space<vmem>>, vector<1x32xf32>
    %12 = vector.broadcast %11 : vector<1x32xf32> to vector<16x32xf32>
    %13 = arith.addf %10, %12 : vector<16x32xf32>
    %14 = arith.truncf %13 : vector<16x32xf32> to vector<16x32xbf16>
    %c0_12 = arith.constant 0 : index
    %c0_13 = arith.constant 0 : index
    %15 = vector.load %arg9[%c0_12, %c0_13] : memref<16x32xbf16, #tpu.memory_space<vmem>>, vector<16x32xbf16>
    tpu.vector_store %arg9[%c0_12, %c0_13], %14 {strides = array<i32>} : memref<16x32xbf16, #tpu.memory_space<vmem>>, vector<16x32xbf16>,
    %c0_14 = arith.constant 0 : index
    %c0_15 = arith.constant 0 : index
    %16 = vector.load %arg4[%c0_14, %c0_15] : memref<32x32xbf16, #tpu.memory_space<vmem>>, vector<32x32xbf16>
    %cst_16 = arith.constant dense<0.000000e+00> : vector<16x32xf32>
    %17 = tpu.matmul %1, %16, %cst_16 {dimension_numbers = #tpu.dot_dimension_numbers<[1], [0], [0], [1], [0, 0, 1, 1], [], []>} : vector<16x32xbf16>, vector<32x32xbf16>, vector<16x32xf32> -> vector<16x32xf32>
    %c0_17 = arith.constant 0 : index
    %c0_18 = arith.constant 0 : index
    %18 = vector.load %arg7[%c0_17, %c0_18] : memref<1x32xf32, #tpu.memory_space<vmem>>, vector<1x32xf32>
    %19 = vector.broadcast %18 : vector<1x32xf32> to vector<16x32xf32>
    %20 = arith.addf %17, %19 : vector<16x32xf32>
    %21 = arith.truncf %20 : vector<16x32xf32> to vector<16x32xbf16>
    %c0_19 = arith.constant 0 : index
    %c0_20 = arith.constant 0 : index
    %22 = vector.load %arg10[%c0_19, %c0_20] : memref<16x32xbf16, #tpu.memory_space<vmem>>, vector<16x32xbf16>
    tpu.vector_store %arg10[%c0_19, %c0_20], %21 {strides = array<i32>} : memref<16x32xbf16, #tpu.memory_space<vmem>>, vector<16x32xbf16>,
    return
  }
  func.func @transform_0(%arg0: i32) -> (i32, i32) {
    %c0_i32 = arith.constant 0 : i32
    %c0_i32_0 = arith.constant 0 : i32
    return %arg0, %c0_i32 : i32, i32
  }
  func.func @transform_1(%arg0: i32) -> (i32, i32) {
    %c0_i32 = arith.constant 0 : i32
    %c0_i32_0 = arith.constant 0 : i32
    %c0_i32_1 = arith.constant 0 : i32
    return %c0_i32, %c0_i32_0 : i32, i32
  }
  func.func @transform_2(%arg0: i32) -> (i32, i32) {
    %c0_i32 = arith.constant 0 : i32
    %c0_i32_0 = arith.constant 0 : i32
    %c0_i32_1 = arith.constant 0 : i32
    return %c0_i32, %c0_i32_0 : i32, i32
  }
  func.func @transform_3(%arg0: i32) -> (i32, i32) {
    %c0_i32 = arith.constant 0 : i32
    %c0_i32_0 = arith.constant 0 : i32
    %c0_i32_1 = arith.constant 0 : i32
    return %c0_i32, %c0_i32_0 : i32, i32
  }
  func.func @transform_4(%arg0: i32) -> (i32, i32) {
    %c0_i32 = arith.constant 0 : i32
    %c0_i32_0 = arith.constant 0 : i32
    %c0_i32_1 = arith.constant 0 : i32
    return %c0_i32, %c0_i32_0 : i32, i32
  }
  func.func @transform_5(%arg0: i32) -> (i32, i32) {
    %c0_i32 = arith.constant 0 : i32
    %c0_i32_0 = arith.constant 0 : i32
    %c0_i32_1 = arith.constant 0 : i32
    return %c0_i32, %c0_i32_0 : i32, i32
  }
  func.func @transform_6(%arg0: i32) -> (i32, i32) {
    %c0_i32 = arith.constant 0 : i32
    %c0_i32_0 = arith.constant 0 : i32
    %c0_i32_1 = arith.constant 0 : i32
    return %c0_i32, %c0_i32_0 : i32, i32
  }
  func.func @transform_7(%arg0: i32) -> (i32, i32) {
    %c0_i32 = arith.constant 0 : i32
    %c0_i32_0 = arith.constant 0 : i32
    return %arg0, %c0_i32 : i32, i32
  }
  func.func @transform_8(%arg0: i32) -> (i32, i32) {
    %c0_i32 = arith.constant 0 : i32
    %c0_i32_0 = arith.constant 0 : i32
    return %arg0, %c0_i32 : i32, i32
  }
  func.func @transform_9(%arg0: i32) -> (i32, i32) {
    %c0_i32 = arith.constant 0 : i32
    %c0_i32_0 = arith.constant 0 : i32
    return %arg0, %c0_i32 : i32, i32
  }
}

</mosaic_0001>

<llo_original>
// kernel: tpu_custom_call.1
$region0: #{tpu_custom_call.1}
  #allocation0 [shape = 'u32[]', space=smem, size = 0x4, offset = 0x4, fixed_abs, tag = 'smem constant byte address 0x4 - core index']
  #allocation1 [shape = 'u32[144,128]{1,0:T(1,128)}', space=vmem, size = 0x12000, scoped, tag = 'internal scratch']
  %s0 = inlined_call_operand.hbm [shape: f32[16,32], index: 0, kind: input, shape index: {}]
  %s1 = inlined_call_operand.hbm [shape: bf16[32,32], index: 1, kind: input, shape index: {}]
  %s2 = inlined_call_operand.hbm [shape: bf16[32,32], index: 2, kind: input, shape index: {}]
  %s3 = inlined_call_operand.hbm [shape: bf16[32,32], index: 3, kind: input, shape index: {}]
  %s4 = inlined_call_operand.vmem [shape: f32[1,32], index: 4, kind: input, shape index: {}]
  %s5 = inlined_call_operand.vmem [shape: f32[1,32], index: 5, kind: input, shape index: {}]
  %s6 = inlined_call_operand.vmem [shape: f32[1,32], index: 6, kind: input, shape index: {}]
  %s7 = inlined_call_operand.hbm [shape: bf16[16,32], index: 7, kind: output, shape index: {0}]
  %s8 = inlined_call_operand.hbm [shape: bf16[16,32], index: 8, kind: output, shape index: {1}]
  %s9 = inlined_call_operand.hbm [shape: bf16[16,32], index: 9, kind: output, shape index: {2}]
  %10 = xla_tuple %s7, %s8, %s9
  %s11 = sld [smem:[#allocation0]]
  $region70: #{tpu_custom_call.1} parent=0
    _
  %s13 = ssub.s32 1, %s11
  %s14 = scalar_select 0, %s13, %s11
  $region1: #{tpu_custom_call.1} parent=0
    #allocation2 [shape = 'u8[8192]{0}', space=vmem, size = 0x2000, scoped, tag = 'input window, operand 0, single buffered']
    #allocation3 [shape = 's32[1]{0}', space=sflag, size = 0x4, scoped, tag = 'scoped memory for tpu_custom_call.1']
    #allocation4 [shape = 's32[1]{0}', space=sflag, size = 0x4, scoped, tag = 'scoped memory for tpu_custom_call.1']
    #allocation5 [shape = 'u8[8192]{0}', space=vmem, size = 0x2000, scoped, tag = 'input window, operand 1, single buffered']
    #allocation6 [shape = 's32[1]{0}', space=sflag, size = 0x4, scoped, tag = 'scoped memory for tpu_custom_call.1']
    #allocation7 [shape = 'u8[8192]{0}', space=vmem, size = 0x2000, scoped, tag = 'input window, operand 2, single buffered']
    #allocation8 [shape = 'u8[8192]{0}', space=vmem, size = 0x2000, scoped, tag = 'input window, operand 3, single buffered']
    #allocation9 [shape = 's32[1]{0}', space=sflag, size = 0x4, scoped, tag = 'scoped memory for tpu_custom_call.1']
    #allocation10 [shape = 'u8[4096]{0}', space=vmem, size = 0x1000, scoped, tag = 'output window, operand 0, single buffered']
    #allocation11 [shape = 'u8[4096]{0}', space=vmem, size = 0x1000, scoped, tag = 'output window, operand 1, single buffered']
    #allocation12 [shape = 's32[1]{0}', space=sflag, size = 0x4, scoped, tag = 'scoped memory for tpu_custom_call.1']
    #allocation13 [shape = 'u8[4096]{0}', space=vmem, size = 0x1000, scoped, tag = 'output window, operand 2, single buffered']
    %15 = vsyncpa [#allocation3], 0
    %16 = vsyncpa [#allocation6], 0
    %17 = vsyncpa [#allocation9], 0
    %18 = vsyncpa [#allocation4], 0
    %19 = vsyncpa [#allocation12], 0
    // Predicated region
    $region2: #{tpu_custom_call.1} parent=1 // pred_check
      _
    $region3: #{tpu_custom_call.1} parent=1 // pred_check_branch
      %21 = sbr.rel (0) target = $region5
    $region4: #{tpu_custom_call.1} parent=1 // pred_region
      %s23 = ssub.s32 256, 256
      %24 = vsyncadd [#allocation3], %s23
      %s25 = sshll.u32 [#allocation2], 4
      %s26 = int_to_ptr.vmem [resolvable:$true] %s25
      %31 = dma.hbm_to_vmem [thread:$0]  %s0, 256, %s26, [#allocation3], 128, 128, 8
    $region5: #{tpu_custom_call.1} parent=1 // pred_fallthru
      _
    // Predicated region
    $region6: #{tpu_custom_call.1} parent=1 // pred_check
      _
    $region7: #{tpu_custom_call.1} parent=1 // pred_check_branch
      %33 = sbr.rel (0) target = $region9
    $region8: #{tpu_custom_call.1} parent=1 // pred_region
      %s35 = ssub.s32 256, 256
      %36 = vsyncadd [#allocation6], %s35
      %s37 = sshll.u32 [#allocation5], 4
      %s38 = int_to_ptr.vmem [resolvable:$true] %s37
      %43 = dma.hbm_to_vmem [thread:$0]  %s1, 256, %s38, [#allocation6], 64, 64, 4
    $region9: #{tpu_custom_call.1} parent=1 // pred_fallthru
      _
    // Predicated region
    $region10: #{tpu_custom_call.1} parent=1 // pred_check
      _
    $region11: #{tpu_custom_call.1} parent=1 // pred_check_branch
      %45 = sbr.rel (0) target = $region13
    $region12: #{tpu_custom_call.1} parent=1 // pred_region
      %s47 = ssub.s32 256, 256
      %48 = vsyncadd [#allocation6], %s47
      %s49 = sshll.u32 [#allocation7], 4
      %s50 = int_to_ptr.vmem [resolvable:$true] %s49
      %55 = dma.hbm_to_vmem [thread:$0]  %s2, 256, %s50, [#allocation6], 64, 64, 4
    $region13: #{tpu_custom_call.1} parent=1 // pred_fallthru
      _
    // Predicated region
    $region14: #{tpu_custom_call.1} parent=1 // pred_check
      _
    $region15: #{tpu_custom_call.1} parent=1 // pred_check_branch
      %57 = sbr.rel (0) target = $region17
    $region16: #{tpu_custom_call.1} parent=1 // pred_region
      %s59 = ssub.s32 256, 256
      %60 = vsyncadd [#allocation9], %s59
      %s61 = sshll.u32 [#allocation8], 4
      %s62 = int_to_ptr.vmem [resolvable:$true] %s61
      %67 = dma.hbm_to_vmem [thread:$0]  %s3, 256, %s62, [#allocation9], 64, 64, 4
    $region17: #{tpu_custom_call.1} parent=1 // pred_fallthru
      _
    // Predicated region
    $region18: #{tpu_custom_call.1} parent=1 // pred_check
      _
    $region19: #{tpu_custom_call.1} parent=1 // pred_check_branch
      %69 = sbr.rel (0) target = $region21
    $region20: #{tpu_custom_call.1} parent=1 // pred_region
      _
    $region21: #{tpu_custom_call.1} parent=1 // pred_fallthru
      _
    // Predicated region
    $region22: #{tpu_custom_call.1} parent=1 // pred_check
      _
    $region23: #{tpu_custom_call.1} parent=1 // pred_check_branch
      %71 = sbr.rel (0) target = $region25
    $region24: #{tpu_custom_call.1} parent=1 // pred_region
      _
    $region25: #{tpu_custom_call.1} parent=1 // pred_fallthru
      _
    // Predicated region
    $region26: #{tpu_custom_call.1} parent=1 // pred_check
      _
    $region27: #{tpu_custom_call.1} parent=1 // pred_check_branch
      %73 = sbr.rel (0) target = $region29
    $region28: #{tpu_custom_call.1} parent=1 // pred_region
      _
    $region29: #{tpu_custom_call.1} parent=1 // pred_fallthru
      _
    // Predicated region
    $region30: #{tpu_custom_call.1} parent=1 // pred_check
      _
    $region31: #{tpu_custom_call.1} parent=1 // pred_check_branch
      %75 = sbr.rel (0) target = $region33
    $region32: #{tpu_custom_call.1} parent=1 // pred_region
      %76 = dma.done [#allocation3], 256
    $region33: #{tpu_custom_call.1} parent=1 // pred_fallthru
      _
    // Predicated region
    $region34: #{tpu_custom_call.1} parent=1 // pred_check
      _
    $region35: #{tpu_custom_call.1} parent=1 // pred_check_branch
      %78 = sbr.rel (0) target = $region37
    $region36: #{tpu_custom_call.1} parent=1 // pred_region
      %79 = dma.done [#allocation6], 256
    $region37: #{tpu_custom_call.1} parent=1 // pred_fallthru
      _
    // Predicated region
    $region38: #{tpu_custom_call.1} parent=1 // pred_check
      _
    $region39: #{tpu_custom_call.1} parent=1 // pred_check_branch
      %81 = sbr.rel (0) target = $region41
    $region40: #{tpu_custom_call.1} parent=1 // pred_region
      %82 = dma.done [#allocation6], 256
    $region41: #{tpu_custom_call.1} parent=1 // pred_fallthru
      _
    // Predicated region
    $region42: #{tpu_custom_call.1} parent=1 // pred_check
      _
    $region43: #{tpu_custom_call.1} parent=1 // pred_check_branch
      %84 = sbr.rel (0) target = $region45
    $region44: #{tpu_custom_call.1} parent=1 // pred_region
      %85 = dma.done [#allocation9], 256
    $region45: #{tpu_custom_call.1} parent=1 // pred_fallthru
      _
    %v87 = vld [vmem:[#allocation2] sm:$0xff]
    %v88 = vld [vmem:[#allocation2 + $0x8] sm:$0xff]
    %v89 = vpack.c.bf16 %v88, %v87
    %v90 = vld [vmem:[#allocation5] sm:$0xf]
    %v91 = vld [vmem:[#allocation5 + $0x4] sm:$0xf]
    %v92 = vld [vmem:[#allocation5 + $0x8] sm:$0xf]
    %v93 = vld [vmem:[#allocation5 + $0xc] sm:$0xf]
    %v94 = vld [vmem:[%s4] sm:$0x1]
    %v96 = vlaneseq
    %v97 = vshrl.u32 %v96, 7
    %v98 = vsub.s32 0, %v97
    %v99 = vrot.slane %v94, %v98
    %v105 = vunpack.c.l.b16 %v90
    %v106 = vunpack.c.l.b16 %v91
    %v107 = vunpack.c.l.b16 %v92
    %v108 = vunpack.c.l.b16 %v93
    %v109 = vpack.c.b16 %v106, %v105
    %v110 = vpack.c.b16 %v108, %v107
    %vm113 = vcmask 261120
    %v115 = vsel %vm113, %v89, 0
    %117 = vmatprep.subr.bf16.mxu0 0
    %118 = vmatpush1.bf16.msra.mxu0 %v109
    %119 = vmatprep.subr.bf16.mxu0 0
    %120 = vmatpush1.bf16.msra.mxu0 %v110
    %121 = vmatprep.subr.bf16.mxu0 0
    %122 = vmatpush1.bf16.msra.mxu0 0
    %123 = vmatprep.subr.bf16.mxu0 0
    %124 = vmatpush1.bf16.msra.mxu0 0
    %125 = vmatprep.subr.bf16.mxu0 0
    %126 = vmatpush1.bf16.msra.mxu0 0
    %127 = vmatprep.subr.bf16.mxu0 0
    %128 = vmatpush1.bf16.msra.mxu0 0
    %129 = vmatprep.subr.bf16.mxu0 0
    %130 = vmatpush1.bf16.msra.mxu0 0
    %131 = vmatprep.subr.bf16.mxu0 0
    %132 = vmatpush1.bf16.msra.mxu0 0
    %133 = vmatprep.subr.bf16.mxu0 0
    %134 = vmatpush1.bf16.msra.mxu0 0
    %135 = vmatprep.subr.bf16.mxu0 0
    %136 = vmatpush1.bf16.msra.mxu0 0
    %137 = vmatprep.subr.bf16.mxu0 0
    %138 = vmatpush1.bf16.msra.mxu0 0
    %139 = vmatprep.subr.bf16.mxu0 0
    %140 = vmatpush1.bf16.msra.mxu0 0
    %141 = vmatprep.subr.bf16.mxu0 0
    %142 = vmatpush1.bf16.msra.mxu0 0
    %143 = vmatprep.subr.bf16.mxu0 0
    %144 = vmatpush1.bf16.msra.mxu0 0
    %145 = vmatprep.subr.bf16.mxu0 0
    %146 = vmatpush1.bf16.msra.mxu0 0
    %147 = vmatprep.subr.bf16.mxu0 0
    %148 = vmatpush1.bf16.msra.mxu0 0
    %149 = vmatprep.mubr.bf16.mxu0 0
    %150 = vmatmul.mubr.bf16.gmra.mrb[0].mxu0 %v115
    %v151 = vpop.f32.mrb[0].mxu0
    %v152 = vadd.f32 %v99, %v151
    %v153 = vpop.f32.mrb[0].mxu0
    %v154 = vpop.f32.mrb[0].mxu0
    %v155 = vadd.f32 %v99, %v154
    %v156 = vpop.f32.mrb[0].mxu0
    %157 = vdwg.mxu0
    %v158 = vpack.c.bf16 %v155, %v152
    %v160 = vunpack.c.l.b16 %v158
    %v161 = vunpack.c.h.b16 %v158
    %v162 = vpack.c.b16 %v160, %v160
    %v163 = vpack.c.b16 %v161, %v161
    %vm166 = vcmask 257024
    %167 = vst.msk [vmem:[#allocation10] sm:$0xf] %vm166, %v162
    %168 = vst.msk [vmem:[#allocation10 + $0x4] sm:$0xf] %vm166, %v163
    %v169 = vld [vmem:[#allocation7] sm:$0xf]
    %v170 = vld [vmem:[#allocation7 + $0x4] sm:$0xf]
    %v171 = vld [vmem:[#allocation7 + $0x8] sm:$0xf]
    %v172 = vld [vmem:[#allocation7 + $0xc] sm:$0xf]
    %v173 = vld [vmem:[%s5] sm:$0x1]
    %v175 = vlaneseq
    %v176 = vshrl.u32 %v175, 7
    %v177 = vsub.s32 0, %v176
    %v178 = vrot.slane %v173, %v177
    %v184 = vunpack.c.l.b16 %v169
    %v185 = vunpack.c.l.b16 %v170
    %v186 = vunpack.c.l.b16 %v171
    %v187 = vunpack.c.l.b16 %v172
    %v188 = vpack.c.b16 %v185, %v184
    %v189 = vpack.c.b16 %v187, %v186
    %192 = vmatprep.subr.bf16.mxu0 0
    %193 = vmatpush1.bf16.msra.mxu0 %v188
    %194 = vmatprep.subr.bf16.mxu0 0
    %195 = vmatpush1.bf16.msra.mxu0 %v189
    %196 = vmatprep.subr.bf16.mxu0 0
    %197 = vmatpush1.bf16.msra.mxu0 0
    %198 = vmatprep.subr.bf16.mxu0 0
    %199 = vmatpush1.bf16.msra.mxu0 0
    %200 = vmatprep.subr.bf16.mxu0 0
    %201 = vmatpush1.bf16.msra.mxu0 0
    %202 = vmatprep.subr.bf16.mxu0 0
    %203 = vmatpush1.bf16.msra.mxu0 0
    %204 = vmatprep.subr.bf16.mxu0 0
    %205 = vmatpush1.bf16.msra.mxu0 0
    %206 = vmatprep.subr.bf16.mxu0 0
    %207 = vmatpush1.bf16.msra.mxu0 0
    %208 = vmatprep.subr.bf16.mxu0 0
    %209 = vmatpush1.bf16.msra.mxu0 0
    %210 = vmatprep.subr.bf16.mxu0 0
    %211 = vmatpush1.bf16.msra.mxu0 0
    %212 = vmatprep.subr.bf16.mxu0 0
    %213 = vmatpush1.bf16.msra.mxu0 0
    %214 = vmatprep.subr.bf16.mxu0 0
    %215 = vmatpush1.bf16.msra.mxu0 0
    %216 = vmatprep.subr.bf16.mxu0 0
    %217 = vmatpush1.bf16.msra.mxu0 0
    %218 = vmatprep.subr.bf16.mxu0 0
    %219 = vmatpush1.bf16.msra.mxu0 0
    %220 = vmatprep.subr.bf16.mxu0 0
    %221 = vmatpush1.bf16.msra.mxu0 0
    %222 = vmatprep.subr.bf16.mxu0 0
    %223 = vmatpush1.bf16.msra.mxu0 0
    %224 = vmatprep.mubr.bf16.mxu0 0
    %225 = vmatmul.mubr.bf16.gmra.mrb[0].mxu0 %v115
    %v226 = vpop.f32.mrb[0].mxu0
    %v227 = vadd.f32 %v178, %v226
    %v228 = vpop.f32.mrb[0].mxu0
    %v229 = vpop.f32.mrb[0].mxu0
    %v230 = vadd.f32 %v178, %v229
    %v231 = vpop.f32.mrb[0].mxu0
    %232 = vdwg.mxu0
    %v233 = vpack.c.bf16 %v230, %v227
    %v235 = vunpack.c.l.b16 %v233
    %v236 = vunpack.c.h.b16 %v233
    %v237 = vpack.c.b16 %v235, %v235
    %v238 = vpack.c.b16 %v236, %v236
    %241 = vst.msk [vmem:[#allocation11] sm:$0xf] %vm166, %v237
    %242 = vst.msk [vmem:[#allocation11 + $0x4] sm:$0xf] %vm166, %v238
    %v243 = vld [vmem:[#allocation8] sm:$0xf]
    %v244 = vld [vmem:[#allocation8 + $0x4] sm:$0xf]
    %v245 = vld [vmem:[#allocation8 + $0x8] sm:$0xf]
    %v246 = vld [vmem:[#allocation8 + $0xc] sm:$0xf]
    %v247 = vld [vmem:[%s6] sm:$0x1]
    %v249 = vlaneseq
    %v250 = vshrl.u32 %v249, 7
    %v251 = vsub.s32 0, %v250
    %v252 = vrot.slane %v247, %v251
    %v258 = vunpack.c.l.b16 %v243
    %v259 = vunpack.c.l.b16 %v244
    %v260 = vunpack.c.l.b16 %v245
    %v261 = vunpack.c.l.b16 %v246
    %v262 = vpack.c.b16 %v259, %v258
    %v263 = vpack.c.b16 %v261, %v260
    %266 = vmatprep.subr.bf16.mxu0 0
    %267 = vmatpush1.bf16.msra.mxu0 %v262
    %268 = vmatprep.subr.bf16.mxu0 0
    %269 = vmatpush1.bf16.msra.mxu0 %v263
    %270 = vmatprep.subr.bf16.mxu0 0
    %271 = vmatpush1.bf16.msra.mxu0 0
    %272 = vmatprep.subr.bf16.mxu0 0
    %273 = vmatpush1.bf16.msra.mxu0 0
    %274 = vmatprep.subr.bf16.mxu0 0
    %275 = vmatpush1.bf16.msra.mxu0 0
    %276 = vmatprep.subr.bf16.mxu0 0
    %277 = vmatpush1.bf16.msra.mxu0 0
    %278 = vmatprep.subr.bf16.mxu0 0
    %279 = vmatpush1.bf16.msra.mxu0 0
    %280 = vmatprep.subr.bf16.mxu0 0
    %281 = vmatpush1.bf16.msra.mxu0 0
    %282 = vmatprep.subr.bf16.mxu0 0
    %283 = vmatpush1.bf16.msra.mxu0 0
    %284 = vmatprep.subr.bf16.mxu0 0
    %285 = vmatpush1.bf16.msra.mxu0 0
    %286 = vmatprep.subr.bf16.mxu0 0
    %287 = vmatpush1.bf16.msra.mxu0 0
    %288 = vmatprep.subr.bf16.mxu0 0
    %289 = vmatpush1.bf16.msra.mxu0 0
    %290 = vmatprep.subr.bf16.mxu0 0
    %291 = vmatpush1.bf16.msra.mxu0 0
    %292 = vmatprep.subr.bf16.mxu0 0
    %293 = vmatpush1.bf16.msra.mxu0 0
    %294 = vmatprep.subr.bf16.mxu0 0
    %295 = vmatpush1.bf16.msra.mxu0 0
    %296 = vmatprep.subr.bf16.mxu0 0
    %297 = vmatpush1.bf16.msra.mxu0 0
    %298 = vmatprep.mubr.bf16.mxu0 0
    %299 = vmatmul.mubr.bf16.gmra.mrb[0].mxu0 %v115
    %v300 = vpop.f32.mrb[0].mxu0
    %v301 = vadd.f32 %v252, %v300
    %v302 = vpop.f32.mrb[0].mxu0
    %v303 = vpop.f32.mrb[0].mxu0
    %v304 = vadd.f32 %v252, %v303
    %v305 = vpop.f32.mrb[0].mxu0
    %306 = vdwg.mxu0
    %v307 = vpack.c.bf16 %v304, %v301
    %v309 = vunpack.c.l.b16 %v307
    %v310 = vunpack.c.h.b16 %v307
    %v311 = vpack.c.b16 %v309, %v309
    %v312 = vpack.c.b16 %v310, %v310
    %315 = vst.msk [vmem:[#allocation13] sm:$0xf] %vm166, %v311
    %316 = vst.msk [vmem:[#allocation13 + $0x4] sm:$0xf] %vm166, %v312
    // Predicated region
    $region46: #{tpu_custom_call.1} parent=1 // pred_check
      _
    $region47: #{tpu_custom_call.1} parent=1 // pred_check_branch
      %318 = sbr.rel (0) target = $region49
    $region48: #{tpu_custom_call.1} parent=1 // pred_region
      %s320 = ssub.s32 128, 128
      %321 = vsyncadd [#allocation4], %s320
      %s322 = sshll.u32 [#allocation10], 4
      %s323 = int_to_ptr.vmem [resolvable:$true] %s322
      %328 = dma.vmem_to_hbm [thread:$0]  %s323, 128, %s7, [#allocation4], 64, 64, 4
    $region49: #{tpu_custom_call.1} parent=1 // pred_fallthru
      _
    // Predicated region
    $region50: #{tpu_custom_call.1} parent=1 // pred_check
      _
    $region51: #{tpu_custom_call.1} parent=1 // pred_check_branch
      %330 = sbr.rel (0) target = $region53
    $region52: #{tpu_custom_call.1} parent=1 // pred_region
      %s332 = ssub.s32 128, 128
      %333 = vsyncadd [#allocation12], %s332
      %s334 = sshll.u32 [#allocation11], 4
      %s335 = int_to_ptr.vmem [resolvable:$true] %s334
      %340 = dma.vmem_to_hbm [thread:$0]  %s335, 128, %s8, [#allocation12], 64, 64, 4
    $region53: #{tpu_custom_call.1} parent=1 // pred_fallthru
      _
    // Predicated region
    $region54: #{tpu_custom_call.1} parent=1 // pred_check
      _
    $region55: #{tpu_custom_call.1} parent=1 // pred_check_branch
      %342 = sbr.rel (0) target = $region57
    $region56: #{tpu_custom_call.1} parent=1 // pred_region
      %s344 = ssub.s32 128, 128
      %345 = vsyncadd [#allocation12], %s344
      %s346 = sshll.u32 [#allocation13], 4
      %s347 = int_to_ptr.vmem [resolvable:$true] %s346
      %352 = dma.vmem_to_hbm [thread:$0]  %s347, 128, %s9, [#allocation12], 64, 64, 4
    $region57: #{tpu_custom_call.1} parent=1 // pred_fallthru
      _
    // Predicated region
    $region58: #{tpu_custom_call.1} parent=1 // pred_check
      _
    $region59: #{tpu_custom_call.1} parent=1 // pred_check_branch
      %354 = sbr.rel (0) target = $region61
    $region60: #{tpu_custom_call.1} parent=1 // pred_region
      %355 = dma.done [#allocation4], 128
    $region61: #{tpu_custom_call.1} parent=1 // pred_fallthru
      _
    // Predicated region
    $region62: #{tpu_custom_call.1} parent=1 // pred_check
      _
    $region63: #{tpu_custom_call.1} parent=1 // pred_check_branch
      %357 = sbr.rel (0) target = $region65
    $region64: #{tpu_custom_call.1} parent=1 // pred_region
      %358 = dma.done [#allocation12], 128
    $region65: #{tpu_custom_call.1} parent=1 // pred_fallthru
      _
    // Predicated region
    $region66: #{tpu_custom_call.1} parent=1 // pred_check
      _
    $region67: #{tpu_custom_call.1} parent=1 // pred_check_branch
      %360 = sbr.rel (0) target = $region69
    $region68: #{tpu_custom_call.1} parent=1 // pred_region
      %361 = dma.done [#allocation12], 128
    $region69: #{tpu_custom_call.1} parent=1 // pred_fallthru
      _
    %362 = vsyncpa [#allocation3], 1
    %363 = vsyncpa [#allocation6], 1
    %364 = vsyncpa [#allocation9], 1
    %365 = vsyncpa [#allocation4], 1
    %366 = vsyncpa [#allocation12], 1

</llo_original>
